<compile_context>
chip_gen: v5e
topology: v5e:2x2
jax: 0.10.0
libtpu: 0.0.40
codegen_flags: <defaults>
</compile_context>

<pallas_src>
import functools

import jax
import jax.numpy as jnp
from jax.experimental import pallas as pl
from jax.experimental.pallas import tpu as pltpu


def _round_up(x, m):
    return ((x + m - 1) // m) * m


def _actor_kernel(min_log_std, max_log_std, a,
                  x_ref, w1_ref, b1_ref, w2_ref, b2_ref, wh_ref, bh_ref,
                  eps_ref, out_ref):
    """One batch tile: 3 matmuls + ReLUs + clamp/exp + reparameterized sample."""
    cdt = w1_ref.dtype
    x = x_ref[...].astype(cdt)                                # cast-in-kernel (bf16 path)

    # feature = ReLU(x @ W1 + b1); feature = ReLU(feature @ W2 + b2)
    h = jnp.dot(x, w1_ref[...], preferred_element_type=jnp.float32) + b1_ref[...]
    h = jnp.maximum(h, 0.0).astype(cdt)
    h = jnp.dot(h, w2_ref[...], preferred_element_type=jnp.float32) + b2_ref[...]
    h = jnp.maximum(h, 0.0).astype(cdt)

    # Fused heads, packed into one 128-lane block: [mu | log_std | 0-pad].
    heads = jnp.dot(h, wh_ref[...], preferred_element_type=jnp.float32) + bh_ref[...]
    mu = heads[:, :a]
    log_std = jnp.clip(heads[:, a:2 * a], min_log_std, max_log_std)
    std = jnp.exp(log_std)
    action = mu + std * eps_ref[...]                          # dist.sample()

    # Single lane-dense output slab: lanes [0,A)=action, [A,2A)=mu, [2A,3A)=std.
    out_ref[...] = jnp.zeros_like(out_ref)                    # keep pad lanes clean
    out_ref[:, :a] = action
    out_ref[:, a:2 * a] = mu
    out_ref[:, 2 * a:3 * a] = std


def pack_params(params, dtype=jnp.bfloat16):
    """Pads the hidden width to 128 lanes and fuses the two heads into one
    128-lane-aligned block.  `dtype` is the matmul-input precision of the
    weights (bfloat16 = native MXU on v5e/v6e/v7x); biases stay float32."""
    n_states, hidden = params["w1"].shape
    n_actions = params["wm"].shape[1]
    h_pad = _round_up(max(hidden, 1), 128)
    head_cols = _round_up(max(2 * n_actions, 1), 128)

    def pad2(x, rows, cols):
        return jnp.pad(x, ((0, rows - x.shape[0]), (0, cols - x.shape[1])))

    wh = (jnp.zeros((h_pad, head_cols), jnp.float32)
          .at[:hidden, :n_actions].set(params["wm"])
          .at[:hidden, n_actions:2 * n_actions].set(params["ws"]))
    bh = (jnp.zeros((1, head_cols), jnp.float32)
          .at[:, :n_actions].set(params["bm"])
          .at[:, n_actions:2 * n_actions].set(params["bs"]))

    packed = dict(
        w1=pad2(params["w1"], n_states, h_pad).astype(dtype),   # rows kept natural
        b1=pad2(params["b1"], 1, h_pad).astype(jnp.float32),
        w2=pad2(params["w2"], h_pad, h_pad).astype(dtype),
        b2=pad2(params["b2"], 1, h_pad).astype(jnp.float32),
        wh=wh.astype(dtype),
        bh=bh.astype(jnp.float32),
    )
    packed["meta"] = (n_states, n_actions, hidden, h_pad, head_cols)
    return packed


def actor_forward(state, packed, eps, *, min_log_std=-20.0, max_log_std=2.0,
                  block_batch=512):
    """Full ActorNetwork forward in a single Pallas call.

    Returns (action, mu, std); (mu, std) fully characterize the Normal `dist`
    returned by the PyTorch module.
    """
    n_states, n_actions, _hidden, h_pad, head_cols = packed["meta"]
    out_cols = _round_up(3 * n_actions, 128)
    cdt = packed["w1"].dtype

    batch = state.shape[0]
    b8 = _round_up(batch, 8)
    tb = _round_up(min(block_batch, b8), 8)          # batch tile, multiple of 8
    if b8 >= 16 and b8 <= tb:
        # Force >= 2 grid steps so v7x can shard the parallel batch axis across
        # its two TensorCores (no effect on single-TC v5e/v6e).
        tb = _round_up(pl.cdiv(b8, 2), 8)
    b_pad = _round_up(batch, tb)
    grid = (b_pad // tb,)

    # Natural lane widths (no 128-lane padding); only cheap row padding if needed.
    x = state.astype(jnp.float32)
    e = eps.astype(jnp.float32)
    if b_pad != batch:
        x = jnp.pad(x, ((0, b_pad - batch), (0, 0)))
        e = jnp.pad(e, ((0, b_pad - batch), (0, 0)))

    kernel = functools.partial(
        _actor_kernel, float(min_log_std), float(max_log_std), n_actions)

    w_item = jnp.dtype(cdt).itemsize
    weight_bytes = (w_item * (n_states * h_pad + h_pad * h_pad + h_pad * head_cols)
                    + 4 * (2 * h_pad + head_cols))
    tile_bytes = 4 * tb * (n_states + n_actions + out_cols)
    vmem_need = weight_bytes + 2 * tile_bytes        # resident weights + 2x-buffered tiles
    vmem_limit = int(min(64 << 20, max(32 << 20, 2 * vmem_need)))

    cost = pl.CostEstimate(
        flops=2 * b_pad * (n_states * h_pad + h_pad * h_pad + h_pad * head_cols),
        transcendentals=b_pad * n_actions,
        bytes_accessed=int(weight_bytes + 4 * b_pad * (n_states + n_actions + out_cols)),
    )

    out = pl.pallas_call(
        kernel,
        out_shape=jax.ShapeDtypeStruct((b_pad, out_cols), jnp.float32),
        grid=grid,
        in_specs=[
            pl.BlockSpec((tb, n_states), lambda i: (i, 0)),       # state tile (natural width)
            pl.BlockSpec((n_states, h_pad), lambda i: (0, 0)),    # w1 (VMEM-resident)
            pl.BlockSpec((1, h_pad), lambda i: (0, 0)),           # b1
            pl.BlockSpec((h_pad, h_pad), lambda i: (0, 0)),       # w2
            pl.BlockSpec((1, h_pad), lambda i: (0, 0)),           # b2
            pl.BlockSpec((h_pad, head_cols), lambda i: (0, 0)),   # packed heads W
            pl.BlockSpec((1, head_cols), lambda i: (0, 0)),       # packed heads b
            pl.BlockSpec((tb, n_actions), lambda i: (i, 0)),      # eps tile (natural width)
        ],
        out_specs=pl.BlockSpec((tb, out_cols), lambda i: (i, 0)),
        compiler_params=pltpu.CompilerParams(
            dimension_semantics=("parallel",),
            vmem_limit_bytes=vmem_limit),
        cost_estimate=cost,
    )(x, packed["w1"], packed["b1"], packed["w2"], packed["b2"],
      packed["wh"], packed["bh"], e)

    action = out[:batch, :n_actions]
    mu = out[:batch, n_actions:2 * n_actions]
    std = out[:batch, 2 * n_actions:3 * n_actions]
    return action, mu, std


def init_params(key, n_states, n_actions, hidden_size):
    """Deterministic init mimicking PyTorch Linear default U(-1/sqrt(fan_in), ...)."""
    def linear(k, fan_in, fan_out):
        kw, kb = jax.random.split(k)
        bound = 1.0 / jnp.sqrt(fan_in)
        w = jax.random.uniform(kw, (fan_in, fan_out), jnp.float32, -bound, bound)
        b = jax.random.uniform(kb, (1, fan_out), jnp.float32, -bound, bound)
        return w, b

    k1, k2, k3, k4 = jax.random.split(key, 4)
    w1, b1 = linear(k1, n_states, hidden_size)
    w2, b2 = linear(k2, hidden_size, hidden_size)
    wm, bm = linear(k3, hidden_size, n_actions)
    ws, bs = linear(k4, hidden_size, n_actions)
    return dict(w1=w1, b1=b1, w2=w2, b2=b2, wm=wm, bm=bm, ws=ws, bs=bs)


def reference_forward(state, params, eps, *, dtype=jnp.float32,
                      min_log_std=-20.0, max_log_std=2.0):
    """Pure-JAX reference; `dtype` mimics the kernel's matmul-input precision."""
    def mm(x, w):
        return jnp.dot(x.astype(dtype), w.astype(dtype),
                       preferred_element_type=jnp.float32)
    h = jnp.maximum(mm(state, params["w1"]) + params["b1"], 0.0)
    h = jnp.maximum(mm(h, params["w2"]) + params["b2"], 0.0)
    mu = mm(h, params["wm"]) + params["bm"]
    log_std = jnp.clip(mm(h, params["ws"]) + params["bs"], min_log_std, max_log_std)
    std = jnp.exp(log_std)
    return mu + std * eps, mu, std


if __name__ == "__main__":
    # Small shapes consistent with the module: state is [B, n_states].
    B, n_states, n_actions, hidden_size = 8, 16, 4, 32

    key = jax.random.PRNGKey(0)
    k_params, k_state, k_eps, k_state2, k_eps2 = jax.random.split(key, 5)
    params = init_params(k_params, n_states, n_actions, hidden_size)

    state = jax.random.normal(k_state, (B, n_states), jnp.float32)
    # dist.sample() is stochastic in PyTorch; eps is drawn outside the kernel and
    # the reparameterization mu + std*eps is applied inside the kernel.
    eps = jax.random.normal(k_eps, (B, n_actions), jnp.float32)

    # --- f32-packed path: tight check against a pure-f32 reference ------------
    packed_f32 = pack_params(params, dtype=jnp.float32)
    action, mu, std = actor_forward(state, packed_f32, eps)
    jax.block_until_ready((action, mu, std))
    ra, rm, rs = reference_forward(state, params, eps, dtype=jnp.float32)
    assert jnp.allclose(action, ra, atol=1e-5, rtol=1e-5)
    assert jnp.allclose(mu, rm, atol=1e-5, rtol=1e-5)
    assert jnp.allclose(std, rs, atol=1e-5, rtol=1e-5)

    # --- default bf16-packed path (MXU-native inputs), non-tile-multiple batch
    #     exercises row padding + a 2-step grid (v7x dual-TC sharding) ----------
    packed_bf16 = pack_params(params)                 # bfloat16 matmul inputs
    B2 = 300
    state2 = jax.random.normal(k_state2, (B2, n_states), jnp.float32)
    eps2 = jax.random.normal(k_eps2, (B2, n_actions), jnp.float32)
    a2, m2, s2 = actor_forward(state2, packed_bf16, eps2)
    jax.block_until_ready((a2, m2, s2))
    ra2, rm2, rs2 = reference_forward(state2, params, eps2, dtype=jnp.bfloat16)
    assert jnp.allclose(a2, ra2, atol=1e-2, rtol=1e-2)
    assert jnp.allclose(m2, rm2, atol=1e-2, rtol=1e-2)
    assert jnp.allclose(s2, rs2, atol=1e-2, rtol=1e-2)

    print("KERNEL_OK")
</pallas_src>

<mosaic_0001>
module attributes {stable_mosaic.version = 11 : i64} {
  func.func @_actor_kernel(%arg0: i32, %arg1: memref<8x16xf32, #tpu.memory_space<vmem>>, %arg2: memref<16x128xf32, #tpu.memory_space<vmem>>, %arg3: memref<1x128xf32, #tpu.memory_space<vmem>>, %arg4: memref<128x128xf32, #tpu.memory_space<vmem>>, %arg5: memref<1x128xf32, #tpu.memory_space<vmem>>, %arg6: memref<128x128xf32, #tpu.memory_space<vmem>>, %arg7: memref<1x128xf32, #tpu.memory_space<vmem>>, %arg8: memref<8x4xf32, #tpu.memory_space<vmem>>, %arg9: memref<8x128xf32, #tpu.memory_space<vmem>>) attributes {dimension_semantics = [#tpu.dimension_semantics<parallel>], iteration_bounds = array<i64: 1>, scalar_prefetch = 0 : i64, scratch_operands = 0 : i64, tpu.core_type = #tpu.core_type<tc>, window_params = [{transform_indices = @transform_0, window_bounds = array<i64: 8, 16>}, {pipeline_mode = #tpu.pipeline_mode<synchronous>, transform_indices = @transform_1, window_bounds = array<i64: 16, 128>}, {pipeline_mode = #tpu.pipeline_mode<synchronous>, transform_indices = @transform_2, window_bounds = array<i64: 1, 128>}, {pipeline_mode = #tpu.pipeline_mode<synchronous>, transform_indices = @transform_3, window_bounds = array<i64: 128, 128>}, {pipeline_mode = #tpu.pipeline_mode<synchronous>, transform_indices = @transform_4, window_bounds = array<i64: 1, 128>}, {pipeline_mode = #tpu.pipeline_mode<synchronous>, transform_indices = @transform_5, window_bounds = array<i64: 128, 128>}, {pipeline_mode = #tpu.pipeline_mode<synchronous>, transform_indices = @transform_6, window_bounds = array<i64: 1, 128>}, {transform_indices = @transform_7, window_bounds = array<i64: 8, 4>}, {transform_indices = @transform_8, window_bounds = array<i64: 8, 128>}]} {
    %c0 = arith.constant 0 : index
    %c0_0 = arith.constant 0 : index
    %0 = vector.load %arg1[%c0, %c0_0] : memref<8x16xf32, #tpu.memory_space<vmem>>, vector<8x16xf32>
    %c0_1 = arith.constant 0 : index
    %c0_2 = arith.constant 0 : index
    %1 = vector.load %arg2[%c0_1, %c0_2] : memref<16x128xf32, #tpu.memory_space<vmem>>, vector<16x128xf32>
    %cst = arith.constant dense<0.000000e+00> : vector<8x128xf32>
    %2 = tpu.matmul %0, %1, %cst {dimension_numbers = #tpu.dot_dimension_numbers<[1], [0], [0], [1], [0, 0, 1, 1], [], []>} : vector<8x16xf32>, vector<16x128xf32>, vector<8x128xf32> -> vector<8x128xf32>
    %c0_3 = arith.constant 0 : index
    %c0_4 = arith.constant 0 : index
    %3 = vector.load %arg3[%c0_3, %c0_4] : memref<1x128xf32, #tpu.memory_space<vmem>>, vector<1x128xf32>
    %4 = vector.broadcast %3 : vector<1x128xf32> to vector<8x128xf32>
    %5 = arith.addf %2, %4 : vector<8x128xf32>
    %cst_5 = arith.constant 0.000000e+00 : f32
    %6 = vector.broadcast %cst_5 : f32 to vector<8x128xf32>
    %7 = arith.maximumf %5, %6 : vector<8x128xf32>
    %c0_6 = arith.constant 0 : index
    %c0_7 = arith.constant 0 : index
    %8 = vector.load %arg4[%c0_6, %c0_7] : memref<128x128xf32, #tpu.memory_space<vmem>>, vector<128x128xf32>
    %cst_8 = arith.constant dense<0.000000e+00> : vector<8x128xf32>
    %9 = tpu.matmul %7, %8, %cst_8 {dimension_numbers = #tpu.dot_dimension_numbers<[1], [0], [0], [1], [0, 0, 1, 1], [], []>} : vector<8x128xf32>, vector<128x128xf32>, vector<8x128xf32> -> vector<8x128xf32>
    %c0_9 = arith.constant 0 : index
    %c0_10 = arith.constant 0 : index
    %10 = vector.load %arg5[%c0_9, %c0_10] : memref<1x128xf32, #tpu.memory_space<vmem>>, vector<1x128xf32>
    %11 = vector.broadcast %10 : vector<1x128xf32> to vector<8x128xf32>
    %12 = arith.addf %9, %11 : vector<8x128xf32>
    %cst_11 = arith.constant 0.000000e+00 : f32
    %13 = vector.broadcast %cst_11 : f32 to vector<8x128xf32>
    %14 = arith.maximumf %12, %13 : vector<8x128xf32>
    %c0_12 = arith.constant 0 : index
    %c0_13 = arith.constant 0 : index
    %15 = vector.load %arg6[%c0_12, %c0_13] : memref<128x128xf32, #tpu.memory_space<vmem>>, vector<128x128xf32>
    %cst_14 = arith.constant dense<0.000000e+00> : vector<8x128xf32>
    %16 = tpu.matmul %14, %15, %cst_14 {dimension_numbers = #tpu.dot_dimension_numbers<[1], [0], [0], [1], [0, 0, 1, 1], [], []>} : vector<8x128xf32>, vector<128x128xf32>, vector<8x128xf32> -> vector<8x128xf32>
    %c0_15 = arith.constant 0 : index
    %c0_16 = arith.constant 0 : index
    %17 = vector.load %arg7[%c0_15, %c0_16] : memref<1x128xf32, #tpu.memory_space<vmem>>, vector<1x128xf32>
    %18 = vector.broadcast %17 : vector<1x128xf32> to vector<8x128xf32>
    %19 = arith.addf %16, %18 : vector<8x128xf32>
    %20 = vector.extract_strided_slice %19 {offsets = [0, 0], sizes = [8, 4], strides = [1, 1]} : vector<8x128xf32> to vector<8x4xf32>
    %21 = vector.extract_strided_slice %19 {offsets = [0, 4], sizes = [8, 4], strides = [1, 1]} : vector<8x128xf32> to vector<8x4xf32>
    %cst_17 = arith.constant -2.000000e+01 : f32
    %cst_18 = arith.constant 2.000000e+00 : f32
    %22 = vector.broadcast %cst_17 : f32 to vector<8x4xf32>
    %23 = arith.maximumf %22, %21 : vector<8x4xf32>
    %24 = vector.broadcast %cst_18 : f32 to vector<8x4xf32>
    %25 = arith.minimumf %24, %23 : vector<8x4xf32>
    %26 = math.exp %25 : vector<8x4xf32>
    %c0_19 = arith.constant 0 : index
    %c0_20 = arith.constant 0 : index
    %27 = vector.load %arg8[%c0_19, %c0_20] : memref<8x4xf32, #tpu.memory_space<vmem>>, vector<8x4xf32>
    %28 = arith.mulf %26, %27 : vector<8x4xf32>
    %29 = arith.addf %20, %28 : vector<8x4xf32>
    %cst_21 = arith.constant 0.000000e+00 : f32
    %30 = vector.broadcast %cst_21 : f32 to vector<8x128xf32>
    %c0_22 = arith.constant 0 : index
    %c0_23 = arith.constant 0 : index
    %31 = vector.load %arg9[%c0_22, %c0_23] : memref<8x128xf32, #tpu.memory_space<vmem>>, vector<8x128xf32>
    tpu.vector_store %arg9[%c0_22, %c0_23], %30 {strides = array<i32>} : memref<8x128xf32, #tpu.memory_space<vmem>>, vector<8x128xf32>,
    %c0_24 = arith.constant 0 : index
    %c0_25 = arith.constant 0 : index
    %32 = vector.load %arg9[%c0_24, %c0_25] : memref<8x128xf32, #tpu.memory_space<vmem>>, vector<8x4xf32>
    tpu.vector_store %arg9[%c0_24, %c0_25], %29 {strides = array<i32>} : memref<8x128xf32, #tpu.memory_space<vmem>>, vector<8x4xf32>,
    %c0_26 = arith.constant 0 : index
    %c4 = arith.constant 4 : index
    %33 = vector.load %arg9[%c0_26, %c4] : memref<8x128xf32, #tpu.memory_space<vmem>>, vector<8x4xf32>
    tpu.vector_store %arg9[%c0_26, %c4], %20 {strides = array<i32>} : memref<8x128xf32, #tpu.memory_space<vmem>>, vector<8x4xf32>,
    %c0_27 = arith.constant 0 : index
    %c8 = arith.constant 8 : index
    %34 = vector.load %arg9[%c0_27, %c8] : memref<8x128xf32, #tpu.memory_space<vmem>>, vector<8x4xf32>
    tpu.vector_store %arg9[%c0_27, %c8], %26 {strides = array<i32>} : memref<8x128xf32, #tpu.memory_space<vmem>>, vector<8x4xf32>,
    return
  }
  func.func @transform_0(%arg0: i32) -> (i32, i32) {
    %c0_i32 = arith.constant 0 : i32
    %c0_i32_0 = arith.constant 0 : i32
    return %arg0, %c0_i32 : i32, i32
  }
  func.func @transform_1(%arg0: i32) -> (i32, i32) {
    %c0_i32 = arith.constant 0 : i32
    %c0_i32_0 = arith.constant 0 : i32
    %c0_i32_1 = arith.constant 0 : i32
    return %c0_i32, %c0_i32_0 : i32, i32
  }
  func.func @transform_2(%arg0: i32) -> (i32, i32) {
    %c0_i32 = arith.constant 0 : i32
    %c0_i32_0 = arith.constant 0 : i32
    %c0_i32_1 = arith.constant 0 : i32
    return %c0_i32, %c0_i32_0 : i32, i32
  }
  func.func @transform_3(%arg0: i32) -> (i32, i32) {
    %c0_i32 = arith.constant 0 : i32
    %c0_i32_0 = arith.constant 0 : i32
    %c0_i32_1 = arith.constant 0 : i32
    return %c0_i32, %c0_i32_0 : i32, i32
  }
  func.func @transform_4(%arg0: i32) -> (i32, i32) {
    %c0_i32 = arith.constant 0 : i32
    %c0_i32_0 = arith.constant 0 : i32
    %c0_i32_1 = arith.constant 0 : i32
    return %c0_i32, %c0_i32_0 : i32, i32
  }
  func.func @transform_5(%arg0: i32) -> (i32, i32) {
    %c0_i32 = arith.constant 0 : i32
    %c0_i32_0 = arith.constant 0 : i32
    %c0_i32_1 = arith.constant 0 : i32
    return %c0_i32, %c0_i32_0 : i32, i32
  }
  func.func @transform_6(%arg0: i32) -> (i32, i32) {
    %c0_i32 = arith.constant 0 : i32
    %c0_i32_0 = arith.constant 0 : i32
    %c0_i32_1 = arith.constant 0 : i32
    return %c0_i32, %c0_i32_0 : i32, i32
  }
  func.func @transform_7(%arg0: i32) -> (i32, i32) {
    %c0_i32 = arith.constant 0 : i32
    %c0_i32_0 = arith.constant 0 : i32
    return %arg0, %c0_i32 : i32, i32
  }
  func.func @transform_8(%arg0: i32) -> (i32, i32) {
    %c0_i32 = arith.constant 0 : i32
    %c0_i32_0 = arith.constant 0 : i32
    return %arg0, %c0_i32 : i32, i32
  }
}

</mosaic_0001>

<llo_original>
// kernel: tpu_custom_call.1
$region0: #{tpu_custom_call.1}
  #allocation0 [shape = 'u32[]', space=smem, size = 0x4, offset = 0x4, fixed_abs, tag = 'smem constant byte address 0x4 - core index']
  #allocation1 [shape = 'u32[72,128]{1,0:T(1,128)}', space=vmem, size = 0x9000, scoped, tag = 'internal scratch']
  %s0 = inlined_call_operand.vmem [shape: f32[8,16], index: 0, kind: input, shape index: {}]
  %s1 = inlined_call_operand.hbm [shape: f32[16,128], index: 1, kind: input, shape index: {}]
  %s2 = inlined_call_operand.vmem [shape: f32[1,128], index: 2, kind: input, shape index: {}]
  %s3 = inlined_call_operand.hbm [shape: f32[128,128], index: 3, kind: input, shape index: {}]
  %s4 = inlined_call_operand.vmem [shape: f32[1,128], index: 4, kind: input, shape index: {}]
  %s5 = inlined_call_operand.hbm [shape: f32[128,128], index: 5, kind: input, shape index: {}]
  %s6 = inlined_call_operand.vmem [shape: f32[1,128], index: 6, kind: input, shape index: {}]
  %s7 = inlined_call_operand.vmem [shape: f32[8,4], index: 7, kind: input, shape index: {}]
  %s8 = inlined_call_operand.hbm [shape: f32[8,128], index: 8, kind: output, shape index: {}]
  %s9 = sld [smem:[#allocation0]]
  $region54: #{tpu_custom_call.1} parent=0
    _
  %s11 = ssub.s32 1, %s9
  %s12 = scalar_select 0, %s11, %s9
  $region1: #{tpu_custom_call.1} parent=0
    #allocation2 [shape = 'u8[8192]{0}', space=vmem, size = 0x2000, scoped, tag = 'input window, operand 1, single buffered']
    #allocation3 [shape = 's32[1]{0}', space=sflag, size = 0x4, scoped, tag = 'scoped memory for tpu_custom_call.1']
    #allocation4 [shape = 's32[1]{0}', space=sflag, size = 0x4, scoped, tag = 'scoped memory for tpu_custom_call.1']
    #allocation5 [shape = 'u8[65536]{0}', space=vmem, size = 0x10000, scoped, tag = 'input window, operand 3, single buffered']
    #allocation6 [shape = 's32[1]{0}', space=sflag, size = 0x4, scoped, tag = 'scoped memory for tpu_custom_call.1']
    #allocation7 [shape = 'u8[65536]{0}', space=vmem, size = 0x10000, scoped, tag = 'input window, operand 5, single buffered']
    #allocation8 [shape = 'u8[4096]{0}', space=vmem, size = 0x1000, scoped, tag = 'output window, operand 0, single buffered']
    %13 = vsyncpa [#allocation3], 0
    %14 = vsyncpa [#allocation6], 0
    %15 = vsyncpa [#allocation4], 0
    // Predicated region
    $region2: #{tpu_custom_call.1} parent=1 // pred_check
      _
    $region3: #{tpu_custom_call.1} parent=1 // pred_check_branch
      %17 = sbr.rel (0) target = $region5
    $region4: #{tpu_custom_call.1} parent=1 // pred_region
      _
    $region5: #{tpu_custom_call.1} parent=1 // pred_fallthru
      _
    // Predicated region
    $region6: #{tpu_custom_call.1} parent=1 // pred_check
      _
    $region7: #{tpu_custom_call.1} parent=1 // pred_check_branch
      %19 = sbr.rel (0) target = $region9
    $region8: #{tpu_custom_call.1} parent=1 // pred_region
      %21 = vsyncadd [#allocation3], 0
      %s22 = sshll.u32 %s1, 4
      %s23 = int_to_ptr.hbm [resolvable:$true] %s22
      %s24 = sshll.u32 [#allocation2], 4
      %s25 = int_to_ptr.vmem [resolvable:$true] %s24
      %30 = dma.hbm_to_vmem [thread:$0]  %s23, 256, %s25, [#allocation3], 128, 128, 8
    $region9: #{tpu_custom_call.1} parent=1 // pred_fallthru
      _
    // Predicated region
    $region10: #{tpu_custom_call.1} parent=1 // pred_check
      _
    $region11: #{tpu_custom_call.1} parent=1 // pred_check_branch
      %32 = sbr.rel (0) target = $region13
    $region12: #{tpu_custom_call.1} parent=1 // pred_region
      _
    $region13: #{tpu_custom_call.1} parent=1 // pred_fallthru
      _
    // Predicated region
    $region14: #{tpu_custom_call.1} parent=1 // pred_check
      _
    $region15: #{tpu_custom_call.1} parent=1 // pred_check_branch
      %34 = sbr.rel (0) target = $region17
    $region16: #{tpu_custom_call.1} parent=1 // pred_region
      %36 = vsyncadd [#allocation6], 0
      %s37 = sshll.u32 %s3, 4
      %s38 = int_to_ptr.hbm [resolvable:$true] %s37
      %s39 = sshll.u32 [#allocation5], 4
      %s40 = int_to_ptr.vmem [resolvable:$true] %s39
      %45 = dma.hbm_to_vmem [thread:$0]  %s38, 2048, %s40, [#allocation6], 128, 128, 8
    $region17: #{tpu_custom_call.1} parent=1 // pred_fallthru
      _
    // Predicated region
    $region18: #{tpu_custom_call.1} parent=1 // pred_check
      _
    $region19: #{tpu_custom_call.1} parent=1 // pred_check_branch
      %47 = sbr.rel (0) target = $region21
    $region20: #{tpu_custom_call.1} parent=1 // pred_region
      _
    $region21: #{tpu_custom_call.1} parent=1 // pred_fallthru
      _
    // Predicated region
    $region22: #{tpu_custom_call.1} parent=1 // pred_check
      _
    $region23: #{tpu_custom_call.1} parent=1 // pred_check_branch
      %49 = sbr.rel (0) target = $region25
    $region24: #{tpu_custom_call.1} parent=1 // pred_region
      %51 = vsyncadd [#allocation6], 0
      %s52 = sshll.u32 %s5, 4
      %s53 = int_to_ptr.hbm [resolvable:$true] %s52
      %s54 = sshll.u32 [#allocation7], 4
      %s55 = int_to_ptr.vmem [resolvable:$true] %s54
      %60 = dma.hbm_to_vmem [thread:$0]  %s53, 2048, %s55, [#allocation6], 128, 128, 8
    $region25: #{tpu_custom_call.1} parent=1 // pred_fallthru
      _
    // Predicated region
    $region26: #{tpu_custom_call.1} parent=1 // pred_check
      _
    $region27: #{tpu_custom_call.1} parent=1 // pred_check_branch
      %62 = sbr.rel (0) target = $region29
    $region28: #{tpu_custom_call.1} parent=1 // pred_region
      _
    $region29: #{tpu_custom_call.1} parent=1 // pred_fallthru
      _
    // Predicated region
    $region30: #{tpu_custom_call.1} parent=1 // pred_check
      _
    $region31: #{tpu_custom_call.1} parent=1 // pred_check_branch
      %64 = sbr.rel (0) target = $region33
    $region32: #{tpu_custom_call.1} parent=1 // pred_region
      _
    $region33: #{tpu_custom_call.1} parent=1 // pred_fallthru
      _
    // Predicated region
    $region34: #{tpu_custom_call.1} parent=1 // pred_check
      _
    $region35: #{tpu_custom_call.1} parent=1 // pred_check_branch
      %66 = sbr.rel (0) target = $region37
    $region36: #{tpu_custom_call.1} parent=1 // pred_region
      %68 = dma.done [#allocation3], 256
    $region37: #{tpu_custom_call.1} parent=1 // pred_fallthru
      _
    // Predicated region
    $region38: #{tpu_custom_call.1} parent=1 // pred_check
      _
    $region39: #{tpu_custom_call.1} parent=1 // pred_check_branch
      %70 = sbr.rel (0) target = $region41
    $region40: #{tpu_custom_call.1} parent=1 // pred_region
      %72 = dma.done [#allocation6], 2048
    $region41: #{tpu_custom_call.1} parent=1 // pred_fallthru
      _
    // Predicated region
    $region42: #{tpu_custom_call.1} parent=1 // pred_check
      _
    $region43: #{tpu_custom_call.1} parent=1 // pred_check_branch
      %74 = sbr.rel (0) target = $region45
    $region44: #{tpu_custom_call.1} parent=1 // pred_region
      %76 = dma.done [#allocation6], 2048
    $region45: #{tpu_custom_call.1} parent=1 // pred_fallthru
      _
    %v77 = vld [vmem:[%s0] sm:$0xff]
    %v78 = vld [vmem:[#allocation2] sm:$0xff]
    %v79 = vld [vmem:[#allocation2 + $0x8] sm:$0xff]
    %v80 = vld [vmem:[%s2] sm:$0x1]
    %v82 = vperm.slane %v80, 0
    %vm84 = vcmask 130048
    %v86 = vsel %vm84, %v77, 0
    %88 = vmatpush.msra.mxu0 0.0
    %89 = vmatpush.msra.mxu0 0.0
    %90 = vmatpush.msra.mxu0 0.0
    %91 = vmatpush.msra.mxu0 0.0
    %92 = vmatpush.msra.mxu0 0.0
    %93 = vmatpush.msra.mxu0 0.0
    %94 = vmatpush.msra.mxu0 0.0
    %95 = vmatpush.msra.mxu0 0.0
    %96 = vmatpush.msra.mxu0 0.0
    %97 = vmatpush.msra.mxu0 0.0
    %98 = vmatpush.msra.mxu0 0.0
    %99 = vmatpush.msra.mxu0 0.0
    %100 = vmatpush.msra.mxu0 0.0
    %101 = vmatpush.msra.mxu0 0.0
    %102 = vmatpush.msra.mxu0 %v79
    %103 = vmatpush.msra.mxu0 %v78
    %104 = vmatmul.f32.gmra.mxu0 %v86
    %v105 = vpop.f32.mrf.mxu0
    %v106 = vadd.f32 %v82, %v105
    %107 = vdwg.mxu0
    %v108 = vmax.f32 %v106, 0.0
    %v109 = vld [vmem:[#allocation5] sm:$0xff]
    %v110 = vld [vmem:[#allocation5 + $0x8] sm:$0xff]
    %v111 = vld [vmem:[#allocation5 + $0x10] sm:$0xff]
    %v112 = vld [vmem:[#allocation5 + $0x18] sm:$0xff]
    %v113 = vld [vmem:[#allocation5 + $0x20] sm:$0xff]
    %v114 = vld [vmem:[#allocation5 + $0x28] sm:$0xff]
    %v115 = vld [vmem:[#allocation5 + $0x30] sm:$0xff]
    %v116 = vld [vmem:[#allocation5 + $0x38] sm:$0xff]
    %v117 = vld [vmem:[#allocation5 + $0x40] sm:$0xff]
    %v118 = vld [vmem:[#allocation5 + $0x48] sm:$0xff]
    %v119 = vld [vmem:[#allocation5 + $0x50] sm:$0xff]
    %v120 = vld [vmem:[#allocation5 + $0x58] sm:$0xff]
    %v121 = vld [vmem:[#allocation5 + $0x60] sm:$0xff]
    %v122 = vld [vmem:[#allocation5 + $0x68] sm:$0xff]
    %v123 = vld [vmem:[#allocation5 + $0x70] sm:$0xff]
    %v124 = vld [vmem:[#allocation5 + $0x78] sm:$0xff]
    %v125 = vld [vmem:[%s4] sm:$0x1]
    %v127 = vperm.slane %v125, 0
    %129 = vmatpush.msra.mxu0 %v124
    %130 = vmatpush.msra.mxu0 %v123
    %131 = vmatpush.msra.mxu0 %v122
    %132 = vmatpush.msra.mxu0 %v121
    %133 = vmatpush.msra.mxu0 %v120
    %134 = vmatpush.msra.mxu0 %v119
    %135 = vmatpush.msra.mxu0 %v118
    %136 = vmatpush.msra.mxu0 %v117
    %137 = vmatpush.msra.mxu0 %v116
    %138 = vmatpush.msra.mxu0 %v115
    %139 = vmatpush.msra.mxu0 %v114
    %140 = vmatpush.msra.mxu0 %v113
    %141 = vmatpush.msra.mxu0 %v112
    %142 = vmatpush.msra.mxu0 %v111
    %143 = vmatpush.msra.mxu0 %v110
    %144 = vmatpush.msra.mxu0 %v109
    %145 = vmatmul.f32.gmra.mxu0 %v108
    %v146 = vpop.f32.mrf.mxu0
    %v147 = vadd.f32 %v127, %v146
    %148 = vdwg.mxu0
    %v149 = vmax.f32 %v147, 0.0
    %v150 = vld [vmem:[#allocation7] sm:$0xff]
    %v151 = vld [vmem:[#allocation7 + $0x8] sm:$0xff]
    %v152 = vld [vmem:[#allocation7 + $0x10] sm:$0xff]
    %v153 = vld [vmem:[#allocation7 + $0x18] sm:$0xff]
    %v154 = vld [vmem:[#allocation7 + $0x20] sm:$0xff]
    %v155 = vld [vmem:[#allocation7 + $0x28] sm:$0xff]
    %v156 = vld [vmem:[#allocation7 + $0x30] sm:$0xff]
    %v157 = vld [vmem:[#allocation7 + $0x38] sm:$0xff]
    %v158 = vld [vmem:[#allocation7 + $0x40] sm:$0xff]
    %v159 = vld [vmem:[#allocation7 + $0x48] sm:$0xff]
    %v160 = vld [vmem:[#allocation7 + $0x50] sm:$0xff]
    %v161 = vld [vmem:[#allocation7 + $0x58] sm:$0xff]
    %v162 = vld [vmem:[#allocation7 + $0x60] sm:$0xff]
    %v163 = vld [vmem:[#allocation7 + $0x68] sm:$0xff]
    %v164 = vld [vmem:[#allocation7 + $0x70] sm:$0xff]
    %v165 = vld [vmem:[#allocation7 + $0x78] sm:$0xff]
    %v166 = vld [vmem:[%s6] sm:$0x1]
    %v168 = vperm.slane %v166, 0
    %170 = vmatpush.msra.mxu0 %v165
    %171 = vmatpush.msra.mxu0 %v164
    %172 = vmatpush.msra.mxu0 %v163
    %173 = vmatpush.msra.mxu0 %v162
    %174 = vmatpush.msra.mxu0 %v161
    %175 = vmatpush.msra.mxu0 %v160
    %176 = vmatpush.msra.mxu0 %v159
    %177 = vmatpush.msra.mxu0 %v158
    %178 = vmatpush.msra.mxu0 %v157
    %179 = vmatpush.msra.mxu0 %v156
    %180 = vmatpush.msra.mxu0 %v155
    %181 = vmatpush.msra.mxu0 %v154
    %182 = vmatpush.msra.mxu0 %v153
    %183 = vmatpush.msra.mxu0 %v152
    %184 = vmatpush.msra.mxu0 %v151
    %185 = vmatpush.msra.mxu0 %v150
    %186 = vmatmul.f32.gmra.mxu0 %v149
    %v187 = vpop.f32.mrf.mxu0
    %v188 = vadd.f32 %v168, %v187
    %189 = vdwg.mxu0
    %v190 = vmax.f32 %v188, -20.0
    %v191 = vmin.f32 %v190, 2.0
    %v192 = vmul.f32 %v191, 1.442695
    %v193 = vpow.pop %v192
    %v194 = vld [vmem:[%s7] sm:$0xff]
    %196 = vrot.lane.b32.xlu0 %v194, 4
    %v197 = vpop.permute.xlu0 %196
    %v199 = vmul.f32 %v193, %v197
    %201 = vrot.lane.b32.xlu0 %v199, 124
    %v202 = vpop.permute.xlu0 %201
    %v204 = vadd.f32 %v188, %v202
    %205 = vst [vmem:[#allocation8] sm:$0xff] 0.0
    %vm206 = vcmask 31744
    %207 = vst.msk [vmem:[#allocation8] sm:$0xff] %vm206, %v204
    %209 = vrot.lane.b32.xlu0 %v188, 4
    %v210 = vpop.permute.xlu0 %209
    %vm212 = vcmask 64544
    %213 = vst.msk [vmem:[#allocation8] sm:$0xff] %vm212, %v210
    %215 = vrot.lane.b32.xlu0 %v193, 4
    %v216 = vpop.permute.xlu0 %215
    %vm218 = vcmask 97344
    %219 = vst.msk [vmem:[#allocation8] sm:$0xff] %vm218, %v216
    // Predicated region
    $region46: #{tpu_custom_call.1} parent=1 // pred_check
      _
    $region47: #{tpu_custom_call.1} parent=1 // pred_check_branch
      %221 = sbr.rel (0) target = $region49
    $region48: #{tpu_custom_call.1} parent=1 // pred_region
      %223 = vsyncadd [#allocation4], 0
      %s225 = sshll.u32 [#allocation8], 4
      %s226 = int_to_ptr.vmem [resolvable:$true] %s225
      %s227 = sshll.u32 %s8, 4
      %s228 = int_to_ptr.hbm [resolvable:$true] %s227
      %230 = dma.vmem_to_hbm [thread:$0]  %s226, 128, %s228, [#allocation4]
    $region49: #{tpu_custom_call.1} parent=1 // pred_fallthru
      _
    // Predicated region
    $region50: #{tpu_custom_call.1} parent=1 // pred_check
      _
    $region51: #{tpu_custom_call.1} parent=1 // pred_check_branch
      %232 = sbr.rel (0) target = $region53
    $region52: #{tpu_custom_call.1} parent=1 // pred_region
      %234 = dma.done [#allocation4], 128
    $region53: #{tpu_custom_call.1} parent=1 // pred_fallthru
      _
    %235 = vsyncpa [#allocation3], 1
    %236 = vsyncpa [#allocation6], 1
    %237 = vsyncpa [#allocation4], 1

</llo_original>
